<compile_context>
chip_gen: v6e
topology: v6e:2x2x1
jax: 0.10.0
libtpu: 0.0.40
codegen_flags: <defaults>
</compile_context>

<pallas_src>
import jax
import jax.numpy as jnp
from jax.experimental import pallas as pl
from jax.experimental.pallas import tpu as pltpu


def _permute_kernel(x_ref, o_ref):
    # x_ref : (B, D1, D2)  ->  o_ref : (B, D2, D1)
    o_ref[...] = jnp.transpose(x_ref[...], (0, 2, 1)).astype(o_ref.dtype)


def model_forward(x1):
    """Pallas implementation of Model.forward: returns v1 = permute(0, 2, 1)(x1).

    The module's F.linear(v1, W, b) result is never returned, so it is not
    computed here (pure dead work — see perf review).
    """
    B, D1, D2 = x1.shape
    vmem = pl.BlockSpec(memory_space=pltpu.MemorySpace.VMEM)
    return pl.pallas_call(
        _permute_kernel,
        out_shape=jax.ShapeDtypeStruct((B, D2, D1), x1.dtype),
        in_specs=[vmem],
        out_specs=vmem,
    )(x1)


if __name__ == "__main__":
    key = jax.random.PRNGKey(0)
    kx, = jax.random.split(key, 1)

    # Small shapes consistent with the module: Linear(2, 2) forces D1 = 2.
    B, D1, D2 = 2, 2, 2
    x1 = jax.random.normal(kx, (B, D1, D2), dtype=jnp.float32)

    out = model_forward(x1)
    jax.block_until_ready(out)

    # Reference: the module's forward returns the permute of the input.
    ref = jnp.transpose(x1, (0, 2, 1))
    assert out.shape == ref.shape
    assert jnp.allclose(out, ref, atol=1e-6), "mismatch vs reference permute"

    print("KERNEL_OK")
</pallas_src>

<mosaic_0001>
module attributes {stable_mosaic.version = 11 : i64} {
  func.func @_permute_kernel(%arg0: memref<2x2x2xf32, #tpu.memory_space<vmem>>, %arg1: memref<2x2x2xf32, #tpu.memory_space<vmem>>) attributes {dimension_semantics = [], scalar_prefetch = 0 : i64, scratch_operands = 0 : i64, tpu.core_type = #tpu.core_type<tc>} {
    %c0 = arith.constant 0 : index
    %c0_0 = arith.constant 0 : index
    %c0_1 = arith.constant 0 : index
    %0 = vector.load %arg0[%c0, %c0_0, %c0_1] : memref<2x2x2xf32, #tpu.memory_space<vmem>>, vector<2x2x2xf32>
    %1 = tpu.transpose %0, [0, 2, 1] : vector<2x2x2xf32> -> vector<2x2x2xf32>
    %c0_2 = arith.constant 0 : index
    %c0_3 = arith.constant 0 : index
    %c0_4 = arith.constant 0 : index
    %2 = vector.load %arg1[%c0_2, %c0_3, %c0_4] : memref<2x2x2xf32, #tpu.memory_space<vmem>>, vector<2x2x2xf32>
    tpu.vector_store %arg1[%c0_2, %c0_3, %c0_4], %1 {strides = array<i32>} : memref<2x2x2xf32, #tpu.memory_space<vmem>>, vector<2x2x2xf32>,
    return
  }
}

</mosaic_0001>

<llo_original>
// kernel: tpu_custom_call.1
$region0: #{tpu_custom_call.1}
  #allocation0 [shape = 'u32[]', space=smem, size = 0x4, offset = 0x4, fixed_abs, tag = 'smem constant byte address 0x4 - core index']
  #allocation1 [shape = 'u32[144,128]{1,0:T(1,128)}', space=vmem, size = 0x12000, scoped, tag = 'internal scratch']
  %s0 = inlined_call_operand.hbm [shape: f32[2,2,2], index: 0, kind: input, shape index: {}]
  %s1 = inlined_call_operand.hbm [shape: f32[2,2,2], index: 1, kind: output, shape index: {}]
  %s2 = sld [smem:[#allocation0]]
  $region18: #{tpu_custom_call.1} parent=0
    _
  %s4 = ssub.s32 1, %s2
  %s5 = scalar_select 0, %s4, %s2
  $region1: #{tpu_custom_call.1} parent=0
    #allocation2 [shape = 'u8[2048]{0}', space=vmem, size = 0x800, scoped, tag = 'input window, operand 0, single buffered']
    #allocation3 [shape = 's32[1]{0}', space=sflag, size = 0x4, scoped, tag = 'scoped memory for tpu_custom_call.1']
    #allocation4 [shape = 's32[1]{0}', space=sflag, size = 0x4, scoped, tag = 'scoped memory for tpu_custom_call.1']
    #allocation5 [shape = 'u8[2048]{0}', space=vmem, size = 0x800, scoped, tag = 'output window, operand 0, single buffered']
    %6 = vsyncpa [#allocation3], 0
    %7 = vsyncpa [#allocation4], 0
    // Predicated region
    $region2: #{tpu_custom_call.1} parent=1 // pred_check
      _
    $region3: #{tpu_custom_call.1} parent=1 // pred_check_branch
      %9 = sbr.rel (0) target = $region5
    $region4: #{tpu_custom_call.1} parent=1 // pred_region
      %s11 = ssub.s32 64, 64
      %12 = vsyncadd [#allocation3], %s11
      %s13 = sshll.u32 [#allocation2], 4
      %s14 = int_to_ptr.vmem [resolvable:$true] %s13
      %19 = dma.hbm_to_vmem [thread:$0]  %s0, 64, %s14, [#allocation3], 32, 32, 2
    $region5: #{tpu_custom_call.1} parent=1 // pred_fallthru
      _
    // Predicated region
    $region6: #{tpu_custom_call.1} parent=1 // pred_check
      _
    $region7: #{tpu_custom_call.1} parent=1 // pred_check_branch
      %21 = sbr.rel (0) target = $region9
    $region8: #{tpu_custom_call.1} parent=1 // pred_region
      %22 = dma.done [#allocation3], 64
    $region9: #{tpu_custom_call.1} parent=1 // pred_fallthru
      _
    %v23 = vld [vmem:[#allocation2] sm:$0x3]
    %v24 = vld [vmem:[#allocation2 + $0x2] sm:$0x3]
    %25 = vxpose.xlu0.b32.start [1/16] %v23, 128
    %26 = vxpose.xlu0.b32.cont [2/16] 0.0, 128
    %27 = vxpose.xlu0.b32.cont [3/16] 0.0, 128
    %28 = vxpose.xlu0.b32.cont [4/16] 0.0, 128
    %29 = vxpose.xlu0.b32.cont [5/16] 0.0, 128
    %30 = vxpose.xlu0.b32.cont [6/16] 0.0, 128
    %31 = vxpose.xlu0.b32.cont [7/16] 0.0, 128
    %32 = vxpose.xlu0.b32.cont [8/16] 0.0, 128
    %33 = vxpose.xlu0.b32.cont [9/16] 0.0, 128
    %34 = vxpose.xlu0.b32.cont [10/16] 0.0, 128
    %35 = vxpose.xlu0.b32.cont [11/16] 0.0, 128
    %36 = vxpose.xlu0.b32.cont [12/16] 0.0, 128
    %37 = vxpose.xlu0.b32.cont [13/16] 0.0, 128
    %38 = vxpose.xlu0.b32.cont [14/16] 0.0, 128
    %39 = vxpose.xlu0.b32.cont [15/16] 0.0, 128
    %40 = vxpose.xlu0.b32.end [16/16] 0.0, 128
    %v41 = vpop.trf.xlu0
    %v42 = vpop.trf.xlu0
    %v43 = vpop.trf.xlu0
    %v44 = vpop.trf.xlu0
    %v45 = vpop.trf.xlu0
    %v46 = vpop.trf.xlu0
    %v47 = vpop.trf.xlu0
    %v48 = vpop.trf.xlu0
    %v49 = vpop.trf.xlu0
    %v50 = vpop.trf.xlu0
    %v51 = vpop.trf.xlu0
    %v52 = vpop.trf.xlu0
    %v53 = vpop.trf.xlu0
    %v54 = vpop.trf.xlu0
    %v55 = vpop.trf.xlu0
    %v56 = vpop.trf.xlu0
    %57 = vxpose.xlu0.b32.start [1/16] %v24, 128
    %58 = vxpose.xlu0.b32.cont [2/16] 0.0, 128
    %59 = vxpose.xlu0.b32.cont [3/16] 0.0, 128
    %60 = vxpose.xlu0.b32.cont [4/16] 0.0, 128
    %61 = vxpose.xlu0.b32.cont [5/16] 0.0, 128
    %62 = vxpose.xlu0.b32.cont [6/16] 0.0, 128
    %63 = vxpose.xlu0.b32.cont [7/16] 0.0, 128
    %64 = vxpose.xlu0.b32.cont [8/16] 0.0, 128
    %65 = vxpose.xlu0.b32.cont [9/16] 0.0, 128
    %66 = vxpose.xlu0.b32.cont [10/16] 0.0, 128
    %67 = vxpose.xlu0.b32.cont [11/16] 0.0, 128
    %68 = vxpose.xlu0.b32.cont [12/16] 0.0, 128
    %69 = vxpose.xlu0.b32.cont [13/16] 0.0, 128
    %70 = vxpose.xlu0.b32.cont [14/16] 0.0, 128
    %71 = vxpose.xlu0.b32.cont [15/16] 0.0, 128
    %72 = vxpose.xlu0.b32.end [16/16] 0.0, 128
    %v73 = vpop.trf.xlu0
    %v74 = vpop.trf.xlu0
    %v75 = vpop.trf.xlu0
    %v76 = vpop.trf.xlu0
    %v77 = vpop.trf.xlu0
    %v78 = vpop.trf.xlu0
    %v79 = vpop.trf.xlu0
    %v80 = vpop.trf.xlu0
    %v81 = vpop.trf.xlu0
    %v82 = vpop.trf.xlu0
    %v83 = vpop.trf.xlu0
    %v84 = vpop.trf.xlu0
    %v85 = vpop.trf.xlu0
    %v86 = vpop.trf.xlu0
    %v87 = vpop.trf.xlu0
    %v88 = vpop.trf.xlu0
    %vm89 = vcmask 9216
    %90 = vst.msk [vmem:[#allocation5] sm:$0x3] %vm89, %v41
    %91 = vst.msk [vmem:[#allocation5 + $0x2] sm:$0x3] %vm89, %v73
    // Predicated region
    $region10: #{tpu_custom_call.1} parent=1 // pred_check
      _
    $region11: #{tpu_custom_call.1} parent=1 // pred_check_branch
      %93 = sbr.rel (0) target = $region13
    $region12: #{tpu_custom_call.1} parent=1 // pred_region
      %s95 = ssub.s32 64, 64
      %96 = vsyncadd [#allocation4], %s95
      %s97 = sshll.u32 [#allocation5], 4
      %s98 = int_to_ptr.vmem [resolvable:$true] %s97
      %103 = dma.vmem_to_hbm [thread:$0]  %s98, 64, %s1, [#allocation4], 32, 32, 2
    $region13: #{tpu_custom_call.1} parent=1 // pred_fallthru
      _
    // Predicated region
    $region14: #{tpu_custom_call.1} parent=1 // pred_check
      _
    $region15: #{tpu_custom_call.1} parent=1 // pred_check_branch
      %105 = sbr.rel (0) target = $region17
    $region16: #{tpu_custom_call.1} parent=1 // pred_region
      %106 = dma.done [#allocation4], 64
    $region17: #{tpu_custom_call.1} parent=1 // pred_fallthru
      _
    %107 = vsyncpa [#allocation3], 1
    %108 = vsyncpa [#allocation4], 1

</llo_original>
